<compile_context>
chip_gen: v7x
topology: tpu7x:2x2x1
jax: 0.10.0
libtpu: 0.0.40
codegen_flags: <defaults>
</compile_context>

<pallas_src>
import functools

import jax
import jax.numpy as jnp
from jax.experimental import pallas as pl
from jax.experimental.pallas import tpu as pltpu


def dqn_kernel(x_ref, w1_ref, b1_ref, w2_ref, b2_ref, o_ref, *, fc1_on_mxu):
    x = x_ref[...]                                   # (TB, K), K = input_dim (tiny)

    if fc1_on_mxu:
        # Large tiles: the VPU formulation needs a cross-lane broadcast of each
        # x column (XLU work) per FMA; at tb >= ~512 that can bind, while the
        # MXU is idle apart from the single fc2 burst.  K is padded by Mosaic.
        h = jnp.dot(x, w1_ref[...],
                    preferred_element_type=jnp.float32) + b1_ref[...]
    else:
        # Small tiles: fc1 on the VPU as K broadcast-FMAs, b1 folded into the
        # first one.  (TB,1)*(1,H) broadcasts feed the 4 VALU slots; no MXU.
        k_dim = x_ref.shape[1]
        h = x[:, 0:1] * w1_ref[0:1, :] + b1_ref[...]     # (TB, H)
        for k in range(1, k_dim):                        # static unroll, K tiny
            h = h + x[:, k:k + 1] * w1_ref[k:k + 1, :]

    h = jnp.maximum(h, 0.0)                          # ReLU on the VPU

    # fc2 on the MXU (K=256 contraction, lane-dense padded N), f32 accumulation;
    # only the final store is cast to the (possibly bf16) output dtype.
    out = jnp.dot(h, w2_ref[...], preferred_element_type=jnp.float32)
    o_ref[...] = (out + b2_ref[...]).astype(o_ref.dtype)


def _cdiv(a, b):
    return (a + b - 1) // b


def _round_up(a, b):
    return _cdiv(a, b) * b


def _choose_tiling(batch, block_b, row_align, min_split_batch=256):
    """Pick (tile_rows, padded_batch, num_tiles).

    - tb is derived from the number of tiles (minimizes batch padding),
    - for batch >= min_split_batch the grid has an even number of >= 2 steps
      so the "parallel" batch axis shards across both v7x TensorCores,
    - per-step overhead is amortized by block_b-sized tiles otherwise.
    """
    num_tiles = _cdiv(batch, block_b)
    if batch >= min_split_batch:
        num_tiles = max(num_tiles, 2)
    if num_tiles > 1 and num_tiles % 2:
        num_tiles += 1
    tb = _round_up(_cdiv(batch, num_tiles), row_align)
    return tb, tb * num_tiles, num_tiles


def dqn_forward(x, w1, b1, w2, b2, *, block_b=1024, out_dtype=jnp.float32,
                slice_output=True):
    """x: (B, input_dim) f32; w1: (input_dim, 256); b1: (1, 256);
       w2: (256, output_dim); b2: (1, output_dim).

    Returns (B, output_dim) Q-values (PyTorch forward semantics) when
    slice_output=True; with slice_output=False returns the lane-padded
    (b_pad, n_pad) array so a downstream argmax/max/gather can fuse the slice
    and the padded output is not re-materialized through HBM."""
    B, in_dim = x.shape
    hidden = w1.shape[1]
    out_dim = w2.shape[1]

    # --- Pad fc2 to a lane-dense output width (multiple of 128). ---
    n_pad = max(128, _round_up(out_dim, 128))
    if n_pad != out_dim:
        w2p = jnp.zeros((hidden, n_pad), w2.dtype).at[:, :out_dim].set(w2)
        b2p = jnp.zeros((1, n_pad), b2.dtype).at[:, :out_dim].set(b2)
    else:
        w2p, b2p = w2, b2

    # --- Tile the batch axis; pad rows with zeros (sliced off below). ---
    row_align = 16 if jnp.dtype(out_dtype).itemsize < 4 else 8
    tb, b_pad, num_tiles = _choose_tiling(B, block_b, row_align)
    xp = x if b_pad == B else jnp.zeros((b_pad, in_dim), x.dtype).at[:B].set(x)

    fc1_on_mxu = tb >= 512

    out_itemsize = jnp.dtype(out_dtype).itemsize
    flops = 2 * b_pad * (in_dim * hidden + hidden * n_pad)
    bytes_accessed = (4 * (xp.size + w1.size + b1.size + w2p.size + b2p.size)
                      + out_itemsize * b_pad * n_pad)

    out = pl.pallas_call(
        functools.partial(dqn_kernel, fc1_on_mxu=fc1_on_mxu),
        out_shape=jax.ShapeDtypeStruct((b_pad, n_pad), out_dtype),
        grid=(num_tiles,),
        in_specs=[
            pl.BlockSpec((tb, in_dim), lambda i: (i, 0)),       # x: tiled on batch
            pl.BlockSpec((in_dim, hidden), lambda i: (0, 0)),   # w1: resident
            pl.BlockSpec((1, hidden), lambda i: (0, 0)),        # b1: resident
            pl.BlockSpec((hidden, n_pad), lambda i: (0, 0)),    # w2 (padded)
            pl.BlockSpec((1, n_pad), lambda i: (0, 0)),         # b2 (padded)
        ],
        out_specs=pl.BlockSpec((tb, n_pad), lambda i: (i, 0)),
        compiler_params=pltpu.CompilerParams(
            dimension_semantics=("parallel",)),
        cost_estimate=pl.CostEstimate(
            flops=flops, transcendentals=0, bytes_accessed=bytes_accessed),
    )(xp, w1, b1, w2p, b2p)

    if not slice_output:
        return out
    # Slice back to the real batch / action dimension (consumer can instead
    # use slice_output=False and fuse this into its argmax/gather).
    return out[:B, :out_dim]


def init_params(key, input_dim, hidden, output_dim):
    # Deterministic init mimicking PyTorch Linear's U(-1/sqrt(fan_in), 1/sqrt(fan_in)).
    k1, k2, k3, k4 = jax.random.split(key, 4)
    s1 = 1.0 / jnp.sqrt(jnp.float32(input_dim))
    s2 = 1.0 / jnp.sqrt(jnp.float32(hidden))
    w1 = jax.random.uniform(k1, (input_dim, hidden), jnp.float32, -s1, s1)
    b1 = jax.random.uniform(k2, (1, hidden), jnp.float32, -s1, s1)
    w2 = jax.random.uniform(k3, (hidden, output_dim), jnp.float32, -s2, s2)
    b2 = jax.random.uniform(k4, (1, output_dim), jnp.float32, -s2, s2)
    return w1, b1, w2, b2


# TODO(synk): DQNModel.save (torch.save checkpointing) is host-side I/O with no
# Pallas equivalent; only the forward pass is implemented here.

if __name__ == "__main__":
    # MountainCar: input_dim=2 (position, velocity), output_dim=3 (actions).
    input_dim, hidden, output_dim = 2, 256, 3

    key = jax.random.PRNGKey(0)
    kx, kp, kx2 = jax.random.split(key, 3)
    w1, b1, w2, b2 = init_params(kp, input_dim, hidden, output_dim)

    # 1) Small f32 check (single tile, VPU fc1): exact PyTorch-forward semantics.
    x = jax.random.normal(kx, (8, input_dim), jnp.float32)
    out = dqn_forward(x, w1, b1, w2, b2)
    jax.block_until_ready(out)
    ref = jnp.maximum(x @ w1 + b1, 0.0) @ w2 + b2
    assert out.shape == (8, output_dim)
    assert jnp.allclose(out, ref, atol=1e-5, rtol=1e-5)

    # 2) Replay-batch check: exercises the even >=2-step grid (megacore split),
    #    batch padding, MXU fc1 path, and bf16 output writeback (f32 accum).
    xb = jax.random.normal(kx2, (1100, input_dim), jnp.float32)
    outb = dqn_forward(xb, w1, b1, w2, b2, out_dtype=jnp.bfloat16)
    jax.block_until_ready(outb)
    refb = jnp.maximum(xb @ w1 + b1, 0.0) @ w2 + b2
    assert outb.shape == (1100, output_dim)
    assert jnp.allclose(outb.astype(jnp.float32), refb, atol=5e-2, rtol=5e-2)

    print("KERNEL_OK")
</pallas_src>

<mosaic_0001>
module attributes {stable_mosaic.version = 11 : i64} {
  func.func @dqn_kernel(%arg0: i32, %arg1: memref<8x2xf32, #tpu.memory_space<vmem>>, %arg2: memref<2x256xf32, #tpu.memory_space<vmem>>, %arg3: memref<1x256xf32, #tpu.memory_space<vmem>>, %arg4: memref<256x128xf32, #tpu.memory_space<vmem>>, %arg5: memref<1x128xf32, #tpu.memory_space<vmem>>, %arg6: memref<8x128xf32, #tpu.memory_space<vmem>>) attributes {dimension_semantics = [#tpu.dimension_semantics<parallel>], iteration_bounds = array<i64: 1>, scalar_prefetch = 0 : i64, scratch_operands = 0 : i64, tpu.core_type = #tpu.core_type<tc>, window_params = [{transform_indices = @transform_0, window_bounds = array<i64: 8, 2>}, {pipeline_mode = #tpu.pipeline_mode<synchronous>, transform_indices = @transform_1, window_bounds = array<i64: 2, 256>}, {pipeline_mode = #tpu.pipeline_mode<synchronous>, transform_indices = @transform_2, window_bounds = array<i64: 1, 256>}, {pipeline_mode = #tpu.pipeline_mode<synchronous>, transform_indices = @transform_3, window_bounds = array<i64: 256, 128>}, {pipeline_mode = #tpu.pipeline_mode<synchronous>, transform_indices = @transform_4, window_bounds = array<i64: 1, 128>}, {transform_indices = @transform_5, window_bounds = array<i64: 8, 128>}]} {
    %c0 = arith.constant 0 : index
    %c0_0 = arith.constant 0 : index
    %0 = vector.load %arg1[%c0, %c0_0] : memref<8x2xf32, #tpu.memory_space<vmem>>, vector<8x2xf32>
    %1 = vector.extract_strided_slice %0 {offsets = [0, 0], sizes = [8, 1], strides = [1, 1]} : vector<8x2xf32> to vector<8x1xf32>
    %c0_1 = arith.constant 0 : index
    %c0_2 = arith.constant 0 : index
    %2 = vector.load %arg2[%c0_1, %c0_2] : memref<2x256xf32, #tpu.memory_space<vmem>>, vector<1x256xf32>
    %3 = vector.broadcast %1 : vector<8x1xf32> to vector<8x256xf32>
    %4 = vector.broadcast %2 : vector<1x256xf32> to vector<8x256xf32>
    %5 = arith.mulf %3, %4 : vector<8x256xf32>
    %c0_3 = arith.constant 0 : index
    %c0_4 = arith.constant 0 : index
    %6 = vector.load %arg3[%c0_3, %c0_4] : memref<1x256xf32, #tpu.memory_space<vmem>>, vector<1x256xf32>
    %7 = vector.broadcast %6 : vector<1x256xf32> to vector<8x256xf32>
    %8 = arith.addf %5, %7 : vector<8x256xf32>
    %9 = vector.extract_strided_slice %0 {offsets = [0, 1], sizes = [8, 1], strides = [1, 1]} : vector<8x2xf32> to vector<8x1xf32>
    %c1 = arith.constant 1 : index
    %c0_5 = arith.constant 0 : index
    %10 = vector.load %arg2[%c1, %c0_5] : memref<2x256xf32, #tpu.memory_space<vmem>>, vector<1x256xf32>
    %11 = vector.broadcast %9 : vector<8x1xf32> to vector<8x256xf32>
    %12 = vector.broadcast %10 : vector<1x256xf32> to vector<8x256xf32>
    %13 = arith.mulf %11, %12 : vector<8x256xf32>
    %14 = arith.addf %8, %13 : vector<8x256xf32>
    %cst = arith.constant 0.000000e+00 : f32
    %15 = vector.broadcast %cst : f32 to vector<8x256xf32>
    %16 = arith.maximumf %14, %15 : vector<8x256xf32>
    %c0_6 = arith.constant 0 : index
    %c0_7 = arith.constant 0 : index
    %17 = vector.load %arg4[%c0_6, %c0_7] : memref<256x128xf32, #tpu.memory_space<vmem>>, vector<256x128xf32>
    %cst_8 = arith.constant dense<0.000000e+00> : vector<8x128xf32>
    %18 = tpu.matmul %16, %17, %cst_8 {dimension_numbers = #tpu.dot_dimension_numbers<[1], [0], [0], [1], [0, 0, 1, 1], [], []>} : vector<8x256xf32>, vector<256x128xf32>, vector<8x128xf32> -> vector<8x128xf32>
    %c0_9 = arith.constant 0 : index
    %c0_10 = arith.constant 0 : index
    %19 = vector.load %arg5[%c0_9, %c0_10] : memref<1x128xf32, #tpu.memory_space<vmem>>, vector<1x128xf32>
    %20 = vector.broadcast %19 : vector<1x128xf32> to vector<8x128xf32>
    %21 = arith.addf %18, %20 : vector<8x128xf32>
    %c0_11 = arith.constant 0 : index
    %c0_12 = arith.constant 0 : index
    %22 = vector.load %arg6[%c0_11, %c0_12] : memref<8x128xf32, #tpu.memory_space<vmem>>, vector<8x128xf32>
    tpu.vector_store %arg6[%c0_11, %c0_12], %21 {strides = array<i32>} : memref<8x128xf32, #tpu.memory_space<vmem>>, vector<8x128xf32>,
    return
  }
  func.func @transform_0(%arg0: i32) -> (i32, i32) {
    %c0_i32 = arith.constant 0 : i32
    %c0_i32_0 = arith.constant 0 : i32
    return %arg0, %c0_i32 : i32, i32
  }
  func.func @transform_1(%arg0: i32) -> (i32, i32) {
    %c0_i32 = arith.constant 0 : i32
    %c0_i32_0 = arith.constant 0 : i32
    %c0_i32_1 = arith.constant 0 : i32
    return %c0_i32, %c0_i32_0 : i32, i32
  }
  func.func @transform_2(%arg0: i32) -> (i32, i32) {
    %c0_i32 = arith.constant 0 : i32
    %c0_i32_0 = arith.constant 0 : i32
    %c0_i32_1 = arith.constant 0 : i32
    return %c0_i32, %c0_i32_0 : i32, i32
  }
  func.func @transform_3(%arg0: i32) -> (i32, i32) {
    %c0_i32 = arith.constant 0 : i32
    %c0_i32_0 = arith.constant 0 : i32
    %c0_i32_1 = arith.constant 0 : i32
    return %c0_i32, %c0_i32_0 : i32, i32
  }
  func.func @transform_4(%arg0: i32) -> (i32, i32) {
    %c0_i32 = arith.constant 0 : i32
    %c0_i32_0 = arith.constant 0 : i32
    %c0_i32_1 = arith.constant 0 : i32
    return %c0_i32, %c0_i32_0 : i32, i32
  }
  func.func @transform_5(%arg0: i32) -> (i32, i32) {
    %c0_i32 = arith.constant 0 : i32
    %c0_i32_0 = arith.constant 0 : i32
    return %arg0, %c0_i32 : i32, i32
  }
}

</mosaic_0001>

<llo_original>
// kernel: tpu_custom_call.1
$region0: #{tpu_custom_call.1}
  #allocation0 [shape = 'u32[]', space=smem, size = 0x4, offset = 0x4, fixed_abs, tag = 'smem constant byte address 0x4 - core index']
  #allocation1 [shape = 'u32[144,128]{1,0:T(1,128)}', space=vmem, size = 0x12000, scoped, tag = 'internal scratch']
  %s0 = inlined_call_operand.vmem [shape: f32[8,2], index: 0, kind: input, shape index: {}]
  %s1 = inlined_call_operand.vmem [shape: f32[2,256], index: 1, kind: input, shape index: {}]
  %s2 = inlined_call_operand.vmem [shape: f32[1,256], index: 2, kind: input, shape index: {}]
  %s3 = inlined_call_operand.hbm [shape: f32[256,128], index: 3, kind: input, shape index: {}]
  %s4 = inlined_call_operand.vmem [shape: f32[1,128], index: 4, kind: input, shape index: {}]
  %s5 = inlined_call_operand.hbm [shape: f32[8,128], index: 5, kind: output, shape index: {}]
  %s6 = sld [smem:[#allocation0]]
  $region34: #{tpu_custom_call.1} parent=0
    _
  %s8 = ssub.s32 1, %s6
  %s9 = scalar_select 0, %s8, %s6
  $region1: #{tpu_custom_call.1} parent=0
    #allocation2 [shape = 'u8[131072]{0}', space=vmem, size = 0x20000, scoped, tag = 'input window, operand 3, single buffered']
    #allocation3 [shape = 's32[1]{0}', space=sflag, size = 0x4, scoped, tag = 'scoped memory for tpu_custom_call.1']
    #allocation4 [shape = 's32[1]{0}', space=sflag, size = 0x4, scoped, tag = 'scoped memory for tpu_custom_call.1']
    #allocation5 [shape = 'u8[4096]{0}', space=vmem, size = 0x1000, scoped, tag = 'output window, operand 0, single buffered']
    %10 = vsyncpa [#allocation3], 0
    %11 = vsyncpa [#allocation4], 0
    // Predicated region
    $region2: #{tpu_custom_call.1} parent=1 // pred_check
      _
    $region3: #{tpu_custom_call.1} parent=1 // pred_check_branch
      %13 = sbr.rel (0) target = $region5
    $region4: #{tpu_custom_call.1} parent=1 // pred_region
      _
    $region5: #{tpu_custom_call.1} parent=1 // pred_fallthru
      _
    // Predicated region
    $region6: #{tpu_custom_call.1} parent=1 // pred_check
      _
    $region7: #{tpu_custom_call.1} parent=1 // pred_check_branch
      %15 = sbr.rel (0) target = $region9
    $region8: #{tpu_custom_call.1} parent=1 // pred_region
      _
    $region9: #{tpu_custom_call.1} parent=1 // pred_fallthru
      _
    // Predicated region
    $region10: #{tpu_custom_call.1} parent=1 // pred_check
      _
    $region11: #{tpu_custom_call.1} parent=1 // pred_check_branch
      %17 = sbr.rel (0) target = $region13
    $region12: #{tpu_custom_call.1} parent=1 // pred_region
      _
    $region13: #{tpu_custom_call.1} parent=1 // pred_fallthru
      _
    // Predicated region
    $region14: #{tpu_custom_call.1} parent=1 // pred_check
      _
    $region15: #{tpu_custom_call.1} parent=1 // pred_check_branch
      %19 = sbr.rel (0) target = $region17
    $region16: #{tpu_custom_call.1} parent=1 // pred_region
      %s21 = ssub.s32 4096, 4096
      %22 = vsyncadd [#allocation3], %s21
      %s23 = sshll.u32 [#allocation2], 4
      %s24 = int_to_ptr.vmem [resolvable:$true] %s23
      %29 = dma.hbm_to_vmem [thread:$0]  %s3, 4096, %s24, [#allocation3], 128, 128, 8
    $region17: #{tpu_custom_call.1} parent=1 // pred_fallthru
      _
    // Predicated region
    $region18: #{tpu_custom_call.1} parent=1 // pred_check
      _
    $region19: #{tpu_custom_call.1} parent=1 // pred_check_branch
      %31 = sbr.rel (0) target = $region21
    $region20: #{tpu_custom_call.1} parent=1 // pred_region
      _
    $region21: #{tpu_custom_call.1} parent=1 // pred_fallthru
      _
    // Predicated region
    $region22: #{tpu_custom_call.1} parent=1 // pred_check
      _
    $region23: #{tpu_custom_call.1} parent=1 // pred_check_branch
      %33 = sbr.rel (0) target = $region25
    $region24: #{tpu_custom_call.1} parent=1 // pred_region
      %34 = dma.done [#allocation3], 4096
    $region25: #{tpu_custom_call.1} parent=1 // pred_fallthru
      _
    %v35 = vld [vmem:[%s0] sm:$0xff]
    %v36 = vld [vmem:[%s1] ss:$2 sm:$0x3]
    %38 = vset.pattern.permute.xlu0 0
    %39 = vperm.xlu0 %38, %v35
    %v40 = vpop.permute.xlu0 %39
    %v43 = vlaneseq
    %v44 = vshrl.u32 %v43, 7
    %v45 = vsub.s32 0, %v44
    %v46 = vrot.slane %v36, %v45
    %v47 = vlaneseq
    %v48 = vshrl.u32 %v47, 7
    %v49 = vsub.s32 1, %v48
    %v50 = vrot.slane %v36, %v49
    %v53 = vmul.f32 %v40, %v46
    %v54 = vmul.f32 %v40, %v50
    %v55 = vld [vmem:[%s2] sm:$0x3]
    %v57 = vlaneseq
    %v58 = vshrl.u32 %v57, 7
    %v59 = vsub.s32 0, %v58
    %v60 = vrot.slane %v55, %v59
    %v61 = vlaneseq
    %v62 = vshrl.u32 %v61, 7
    %v63 = vsub.s32 1, %v62
    %v64 = vrot.slane %v55, %v63
    %v67 = vadd.f32 %v53, %v60
    %v68 = vadd.f32 %v54, %v64
    %s69 = scalar_lea.vmem %s1, 1
    %v70 = vld [vmem:[%s69] ss:$2 sm:$0x3]
    %71 = vset.pattern.permute.xlu0 1
    %72 = vperm.xlu0 %71, %v35
    %v73 = vpop.permute.xlu0 %72
    %v76 = vlaneseq
    %v77 = vshrl.u32 %v76, 7
    %v78 = vsub.s32 0, %v77
    %v79 = vrot.slane %v70, %v78
    %v80 = vlaneseq
    %v81 = vshrl.u32 %v80, 7
    %v82 = vsub.s32 1, %v81
    %v83 = vrot.slane %v70, %v82
    %v86 = vmul.f32 %v73, %v79
    %v87 = vmul.f32 %v73, %v83
    %v88 = vadd.f32 %v67, %v86
    %v89 = vadd.f32 %v68, %v87
    %v90 = vmax.f32 %v88, 0.0
    %v91 = vmax.f32 %v89, 0.0
    %v92 = vld [vmem:[#allocation2] sm:$0xff]
    %v93 = vld [vmem:[#allocation2 + $0x8] sm:$0xff]
    %v94 = vld [vmem:[#allocation2 + $0x10] sm:$0xff]
    %v95 = vld [vmem:[#allocation2 + $0x18] sm:$0xff]
    %v96 = vld [vmem:[#allocation2 + $0x20] sm:$0xff]
    %v97 = vld [vmem:[#allocation2 + $0x28] sm:$0xff]
    %v98 = vld [vmem:[#allocation2 + $0x30] sm:$0xff]
    %v99 = vld [vmem:[#allocation2 + $0x38] sm:$0xff]
    %v100 = vld [vmem:[#allocation2 + $0x40] sm:$0xff]
    %v101 = vld [vmem:[#allocation2 + $0x48] sm:$0xff]
    %v102 = vld [vmem:[#allocation2 + $0x50] sm:$0xff]
    %v103 = vld [vmem:[#allocation2 + $0x58] sm:$0xff]
    %v104 = vld [vmem:[#allocation2 + $0x60] sm:$0xff]
    %v105 = vld [vmem:[#allocation2 + $0x68] sm:$0xff]
    %v106 = vld [vmem:[#allocation2 + $0x70] sm:$0xff]
    %v107 = vld [vmem:[#allocation2 + $0x78] sm:$0xff]
    %v108 = vld [vmem:[#allocation2 + $0x80] sm:$0xff]
    %v109 = vld [vmem:[#allocation2 + $0x88] sm:$0xff]
    %v110 = vld [vmem:[#allocation2 + $0x90] sm:$0xff]
    %v111 = vld [vmem:[#allocation2 + $0x98] sm:$0xff]
    %v112 = vld [vmem:[#allocation2 + $0xa0] sm:$0xff]
    %v113 = vld [vmem:[#allocation2 + $0xa8] sm:$0xff]
    %v114 = vld [vmem:[#allocation2 + $0xb0] sm:$0xff]
    %v115 = vld [vmem:[#allocation2 + $0xb8] sm:$0xff]
    %v116 = vld [vmem:[#allocation2 + $0xc0] sm:$0xff]
    %v117 = vld [vmem:[#allocation2 + $0xc8] sm:$0xff]
    %v118 = vld [vmem:[#allocation2 + $0xd0] sm:$0xff]
    %v119 = vld [vmem:[#allocation2 + $0xd8] sm:$0xff]
    %v120 = vld [vmem:[#allocation2 + $0xe0] sm:$0xff]
    %v121 = vld [vmem:[#allocation2 + $0xe8] sm:$0xff]
    %v122 = vld [vmem:[#allocation2 + $0xf0] sm:$0xff]
    %v123 = vld [vmem:[#allocation2 + $0xf8] sm:$0xff]
    %v124 = vld [vmem:[%s4] sm:$0x1]
    %v126 = vlaneseq
    %v127 = vshrl.u32 %v126, 7
    %v128 = vsub.s32 0, %v127
    %v129 = vrot.slane %v124, %v128
    %131 = vmatprep.subr.mxu0 0.0
    %132 = vmatpush1.msra.mxu0 %v92
    %133 = vmatprep.subr.mxu0 0.0
    %134 = vmatpush1.msra.mxu0 %v93
    %135 = vmatprep.subr.mxu0 0.0
    %136 = vmatpush1.msra.mxu0 %v94
    %137 = vmatprep.subr.mxu0 0.0
    %138 = vmatpush1.msra.mxu0 %v95
    %139 = vmatprep.subr.mxu0 0.0
    %140 = vmatpush1.msra.mxu0 %v96
    %141 = vmatprep.subr.mxu0 0.0
    %142 = vmatpush1.msra.mxu0 %v97
    %143 = vmatprep.subr.mxu0 0.0
    %144 = vmatpush1.msra.mxu0 %v98
    %145 = vmatprep.subr.mxu0 0.0
    %146 = vmatpush1.msra.mxu0 %v99
    %147 = vmatprep.subr.mxu0 0.0
    %148 = vmatpush1.msra.mxu0 %v100
    %149 = vmatprep.subr.mxu0 0.0
    %150 = vmatpush1.msra.mxu0 %v101
    %151 = vmatprep.subr.mxu0 0.0
    %152 = vmatpush1.msra.mxu0 %v102
    %153 = vmatprep.subr.mxu0 0.0
    %154 = vmatpush1.msra.mxu0 %v103
    %155 = vmatprep.subr.mxu0 0.0
    %156 = vmatpush1.msra.mxu0 %v104
    %157 = vmatprep.subr.mxu0 0.0
    %158 = vmatpush1.msra.mxu0 %v105
    %159 = vmatprep.subr.mxu0 0.0
    %160 = vmatpush1.msra.mxu0 %v106
    %161 = vmatprep.subr.mxu0 0.0
    %162 = vmatpush1.msra.mxu0 %v107
    %163 = vmatprep.subr.mxu0 0.0
    %164 = vmatpush1.msra.mxu0 %v108
    %165 = vmatprep.subr.mxu0 0.0
    %166 = vmatpush1.msra.mxu0 %v109
    %167 = vmatprep.subr.mxu0 0.0
    %168 = vmatpush1.msra.mxu0 %v110
    %169 = vmatprep.subr.mxu0 0.0
    %170 = vmatpush1.msra.mxu0 %v111
    %171 = vmatprep.subr.mxu0 0.0
    %172 = vmatpush1.msra.mxu0 %v112
    %173 = vmatprep.subr.mxu0 0.0
    %174 = vmatpush1.msra.mxu0 %v113
    %175 = vmatprep.subr.mxu0 0.0
    %176 = vmatpush1.msra.mxu0 %v114
    %177 = vmatprep.subr.mxu0 0.0
    %178 = vmatpush1.msra.mxu0 %v115
    %179 = vmatprep.subr.mxu0 0.0
    %180 = vmatpush1.msra.mxu0 %v116
    %181 = vmatprep.subr.mxu0 0.0
    %182 = vmatpush1.msra.mxu0 %v117
    %183 = vmatprep.subr.mxu0 0.0
    %184 = vmatpush1.msra.mxu0 %v118
    %185 = vmatprep.subr.mxu0 0.0
    %186 = vmatpush1.msra.mxu0 %v119
    %187 = vmatprep.subr.mxu0 0.0
    %188 = vmatpush1.msra.mxu0 %v120
    %189 = vmatprep.subr.mxu0 0.0
    %190 = vmatpush1.msra.mxu0 %v121
    %191 = vmatprep.subr.mxu0 0.0
    %192 = vmatpush1.msra.mxu0 %v122
    %193 = vmatprep.subr.mxu0 0.0
    %194 = vmatpush1.msra.mxu0 %v123
    %195 = vmatprep.mubr.f32.mxu0 %v91
    %196 = vmatmul.mubr.f32.gmra.mrb[0].mxu0 %v90
    %v197 = vpop.f32.mrb[0].mxu0
    %v198 = vadd.f32 %v129, %v197
    %v199 = vpop.f32.mrb[0].mxu0
    %200 = vdwg.mxu0
    %201 = vst [vmem:[#allocation5] sm:$0xff] %v198
    // Predicated region
    $region26: #{tpu_custom_call.1} parent=1 // pred_check
      _
    $region27: #{tpu_custom_call.1} parent=1 // pred_check_branch
      %203 = sbr.rel (0) target = $region29
    $region28: #{tpu_custom_call.1} parent=1 // pred_region
      %s205 = ssub.s32 128, 128
      %206 = vsyncadd [#allocation4], %s205
      %s208 = sshll.u32 [#allocation5], 4
      %s209 = int_to_ptr.vmem [resolvable:$true] %s208
      %211 = dma.vmem_to_hbm [thread:$0]  %s209, 128, %s5, [#allocation4]
    $region29: #{tpu_custom_call.1} parent=1 // pred_fallthru
      _
    // Predicated region
    $region30: #{tpu_custom_call.1} parent=1 // pred_check
      _
    $region31: #{tpu_custom_call.1} parent=1 // pred_check_branch
      %213 = sbr.rel (0) target = $region33
    $region32: #{tpu_custom_call.1} parent=1 // pred_region
      %214 = dma.done [#allocation4], 128
    $region33: #{tpu_custom_call.1} parent=1 // pred_fallthru
      _
    %215 = vsyncpa [#allocation3], 1
    %216 = vsyncpa [#allocation4], 1

</llo_original>
